<compile_context>
chip_gen: v5e
topology: v5e:2x2
jax: 0.10.0
libtpu: 0.0.40
codegen_flags: <defaults>
</compile_context>

<pallas_src>
import math

import jax
import jax.numpy as jnp
from jax.experimental import pallas as pl
from jax.experimental.pallas import tpu as pltpu

_LANE = 128      # TPU lane width
_SUBLANE = 8     # f32 sublane packing

# Module dimensions from the PyTorch spec.
D_IN, D_H1, D_ENC, D_H3, D_OUT = 32, 64, 12, 64, 32

_PACKED = 64     # packed-output width: rec_x in cols [0:32), encode in [32:44)
_ENC_OFF = D_OUT


def _round_up(n, m):
    return ((n + m - 1) // m) * m


def _cdiv(a, b):
    return (a + b - 1) // b


def _place(w, shape, r0=0, c0=0):
    """Zero matrix of `shape` with `w` placed at (r0, c0)."""
    out = jnp.zeros(shape, w.dtype)
    return out.at[r0:r0 + w.shape[0], c0:c0 + w.shape[1]].set(w)


def _place_bias(b, cols, c0=0):
    out = jnp.zeros((1, cols), b.dtype)
    return out.at[0, c0:c0 + b.shape[0]].set(b)


def _choose_tiling(B, batch_tile):
    """Balanced batch tiling: minimal padding, even >=2-step grid for v7x."""
    n = max(1, _cdiv(B, batch_tile))
    if B >= 2 * _SUBLANE:
        n = max(n, 2)          # >=2 grid steps so the 2 TCs on v7x both work
        if n % 2:
            n += 1             # even step count balances the two TensorCores
    tb = _round_up(_cdiv(B, n), _SUBLANE)
    return n, tb               # Bp = n * tb, padding < 8 rows per tile


def _sae_fused_kernel(x_ref, w1_ref, b1_ref, w2_ref, b2_ref,
                      w3_ref, b3_ref, w4_ref, b4_ref, out_ref):
    # x_ref: (tb, 32).  All weight paddings are zero, so padded activation
    # lanes stay exactly 0 through bias(=0)+ReLU and never perturb later
    # matmuls.  The packed weight layout makes `e` and `r` occupy disjoint
    # column ranges of the 64-wide output, so packing is a single add.
    x = x_ref[...]
    h = jnp.maximum(
        jnp.dot(x, w1_ref[...], preferred_element_type=jnp.float32) + b1_ref[...], 0.0)
    e = jnp.maximum(                                   # encode, at cols 32:44
        jnp.dot(h, w2_ref[...], preferred_element_type=jnp.float32) + b2_ref[...], 0.0)
    h = jnp.maximum(
        jnp.dot(e, w3_ref[...], preferred_element_type=jnp.float32) + b3_ref[...], 0.0)
    r = jnp.maximum(                                   # rec_x, at cols 0:32
        jnp.dot(h, w4_ref[...], preferred_element_type=jnp.float32) + b4_ref[...], 0.0)
    out_ref[...] = (r + e).astype(out_ref.dtype)       # disjoint columns -> exact pack


def mysae1_forward(x, padded_params, *, batch_tile=4096):
    """Fused forward: returns (encode (B,12), rec_x (B,32))."""
    w1, b1, w2, b2, w3, b3, w4, b4 = padded_params
    B, d_in = x.shape
    assert d_in == D_IN, f"expected last dim {D_IN}, got {d_in}"

    n, tb = _choose_tiling(B, batch_tile)
    Bp = n * tb
    xp = jnp.pad(x, ((0, Bp - B), (0, 0))) if Bp != B else x

    # Advisory cost hint (padded work / real HBM traffic of this call).
    flops = 2 * Bp * (D_IN * _LANE + _LANE * _PACKED + _PACKED * _LANE + _LANE * _PACKED)
    bytes_w = sum(int(p.size) * p.dtype.itemsize for p in padded_params)
    bytes_accessed = (Bp * D_IN * 4) + bytes_w + (Bp * _PACKED * 4)

    out = pl.pallas_call(
        _sae_fused_kernel,
        out_shape=jax.ShapeDtypeStruct((Bp, _PACKED), x.dtype),
        grid_spec=pltpu.PrefetchScalarGridSpec(
            num_scalar_prefetch=0,
            grid=(n,),
            in_specs=[
                pl.BlockSpec((tb, D_IN), lambda i: (i, 0)),         # batch-tiled x
                pl.BlockSpec((D_IN, _LANE), lambda i: (0, 0)),      # W1 (resident)
                pl.BlockSpec((1, _LANE), lambda i: (0, 0)),         # b1
                pl.BlockSpec((_LANE, _PACKED), lambda i: (0, 0)),   # W2 (enc @ cols 32:44)
                pl.BlockSpec((1, _PACKED), lambda i: (0, 0)),       # b2
                pl.BlockSpec((_PACKED, _LANE), lambda i: (0, 0)),   # W3 (rows 32:44 real)
                pl.BlockSpec((1, _LANE), lambda i: (0, 0)),         # b3
                pl.BlockSpec((_LANE, _PACKED), lambda i: (0, 0)),   # W4 (rec @ cols 0:32)
                pl.BlockSpec((1, _PACKED), lambda i: (0, 0)),       # b4
            ],
            out_specs=pl.BlockSpec((tb, _PACKED), lambda i: (i, 0)),  # packed output
        ),
        compiler_params=pltpu.CompilerParams(
            dimension_semantics=("parallel",),   # shards batch across v7x's 2 TCs
            vmem_limit_bytes=32 << 20,           # safe on v5e/v6e/v7x; ~12 MiB used
        ),
        cost_estimate=pl.CostEstimate(flops=flops, transcendentals=0,
                                      bytes_accessed=bytes_accessed),
    )(xp, w1, b1, w2, b2, w3, b3, w4, b4)

    rec_x = out[:B, :D_OUT]
    encode = out[:B, _ENC_OFF:_ENC_OFF + D_ENC]
    return encode, rec_x


class MySAE1:
    """JAX/Pallas port of the PyTorch MySAE1 forward pass."""

    def __init__(self, key=None, dtype=jnp.float32):
        if key is None:
            key = jax.random.PRNGKey(0)
        ks = jax.random.split(key, 8)

        def linear_init(kw, kb, fan_in, fan_out):
            # PyTorch nn.Linear default: U(-1/sqrt(fan_in), 1/sqrt(fan_in)).
            bound = 1.0 / math.sqrt(fan_in)
            w = jax.random.uniform(kw, (fan_in, fan_out), dtype, -bound, bound)
            b = jax.random.uniform(kb, (fan_out,), dtype, -bound, bound)
            return w, b

        # Stored (in, out) so the kernel does x @ W directly.
        self.w1, self.b1 = linear_init(ks[0], ks[1], D_IN, D_H1)
        self.w2, self.b2 = linear_init(ks[2], ks[3], D_H1, D_ENC)
        self.w3, self.b3 = linear_init(ks[4], ks[5], D_ENC, D_H3)
        self.w4, self.b4 = linear_init(ks[6], ks[7], D_H3, D_OUT)

        # One-time zero-padding into the packed layout:
        #   layer1: (32,128)   h1 real in cols 0:64
        #   layer2: (128,64)   encode placed at output cols 32:44
        #   layer3: (64,128)   decoder1 rows placed at 32:44, h3 real in cols 0:64
        #   layer4: (128,64)   rec_x placed at output cols 0:32
        # Zero padding + zero bias + ReLU keeps padded lanes exactly 0 so the
        # chained matmuls and the final (r + e) pack are exact.
        self._padded = (
            _place(self.w1, (D_IN, _LANE)),            _place_bias(self.b1, _LANE),
            _place(self.w2, (_LANE, _PACKED), 0, _ENC_OFF),
            _place_bias(self.b2, _PACKED, _ENC_OFF),
            _place(self.w3, (_PACKED, _LANE), _ENC_OFF, 0),
            _place_bias(self.b3, _LANE),
            _place(self.w4, (_LANE, _PACKED)),          _place_bias(self.b4, _PACKED),
        )

    def __call__(self, x, *, batch_tile=4096):
        return mysae1_forward(x, self._padded, batch_tile=batch_tile)


def _reference(m, x):
    h = jnp.maximum(x @ m.w1 + m.b1, 0.0)
    enc = jnp.maximum(h @ m.w2 + m.b2, 0.0)
    h = jnp.maximum(enc @ m.w3 + m.b3, 0.0)
    rec = jnp.maximum(h @ m.w4 + m.b4, 0.0)
    return enc, rec


if __name__ == "__main__":
    key = jax.random.PRNGKey(0)
    kx, kp = jax.random.split(key)

    model = MySAE1(key=kp)

    # Small, sublane-aligned batch (single grid step).
    B = 8
    x = jax.random.normal(kx, (B, D_IN), jnp.float32)
    encode, rec_x = model(x)
    encode = jax.block_until_ready(encode)
    rec_x = jax.block_until_ready(rec_x)
    assert encode.shape == (B, D_ENC) and rec_x.shape == (B, D_OUT)
    ref_enc, ref_rec = _reference(model, x)
    assert jnp.allclose(encode, ref_enc, atol=1e-5, rtol=1e-5)
    assert jnp.allclose(rec_x, ref_rec, atol=1e-5, rtol=1e-5)

    # Ragged batch: exercises the balanced tile chooser, padding and the
    # forced >=2-step (even) grid used for v7x megacore sharding.
    B2 = 37
    x2 = jax.random.normal(jax.random.PRNGKey(7), (B2, D_IN), jnp.float32)
    enc2, rec2 = model(x2)
    enc2 = jax.block_until_ready(enc2)
    rec2 = jax.block_until_ready(rec2)
    ref_enc2, ref_rec2 = _reference(model, x2)
    assert enc2.shape == (B2, D_ENC) and rec2.shape == (B2, D_OUT)
    assert jnp.allclose(enc2, ref_enc2, atol=1e-5, rtol=1e-5)
    assert jnp.allclose(rec2, ref_rec2, atol=1e-5, rtol=1e-5)

    print("KERNEL_OK")
</pallas_src>

<mosaic_0001>
module attributes {stable_mosaic.version = 11 : i64} {
  func.func @_sae_fused_kernel(%arg0: i32, %arg1: memref<8x32xf32, #tpu.memory_space<vmem>>, %arg2: memref<32x128xf32, #tpu.memory_space<vmem>>, %arg3: memref<1x128xf32, #tpu.memory_space<vmem>>, %arg4: memref<128x64xf32, #tpu.memory_space<vmem>>, %arg5: memref<1x64xf32, #tpu.memory_space<vmem>>, %arg6: memref<64x128xf32, #tpu.memory_space<vmem>>, %arg7: memref<1x128xf32, #tpu.memory_space<vmem>>, %arg8: memref<128x64xf32, #tpu.memory_space<vmem>>, %arg9: memref<1x64xf32, #tpu.memory_space<vmem>>, %arg10: memref<8x64xf32, #tpu.memory_space<vmem>>) attributes {dimension_semantics = [#tpu.dimension_semantics<parallel>], iteration_bounds = array<i64: 1>, scalar_prefetch = 0 : i64, scratch_operands = 0 : i64, tpu.core_type = #tpu.core_type<tc>, window_params = [{transform_indices = @transform_0, window_bounds = array<i64: 8, 32>}, {pipeline_mode = #tpu.pipeline_mode<synchronous>, transform_indices = @transform_1, window_bounds = array<i64: 32, 128>}, {pipeline_mode = #tpu.pipeline_mode<synchronous>, transform_indices = @transform_2, window_bounds = array<i64: 1, 128>}, {pipeline_mode = #tpu.pipeline_mode<synchronous>, transform_indices = @transform_3, window_bounds = array<i64: 128, 64>}, {pipeline_mode = #tpu.pipeline_mode<synchronous>, transform_indices = @transform_4, window_bounds = array<i64: 1, 64>}, {pipeline_mode = #tpu.pipeline_mode<synchronous>, transform_indices = @transform_5, window_bounds = array<i64: 64, 128>}, {pipeline_mode = #tpu.pipeline_mode<synchronous>, transform_indices = @transform_6, window_bounds = array<i64: 1, 128>}, {pipeline_mode = #tpu.pipeline_mode<synchronous>, transform_indices = @transform_7, window_bounds = array<i64: 128, 64>}, {pipeline_mode = #tpu.pipeline_mode<synchronous>, transform_indices = @transform_8, window_bounds = array<i64: 1, 64>}, {transform_indices = @transform_9, window_bounds = array<i64: 8, 64>}]} {
    %c0 = arith.constant 0 : index
    %c0_0 = arith.constant 0 : index
    %0 = vector.load %arg1[%c0, %c0_0] : memref<8x32xf32, #tpu.memory_space<vmem>>, vector<8x32xf32>
    %c0_1 = arith.constant 0 : index
    %c0_2 = arith.constant 0 : index
    %1 = vector.load %arg2[%c0_1, %c0_2] : memref<32x128xf32, #tpu.memory_space<vmem>>, vector<32x128xf32>
    %cst = arith.constant dense<0.000000e+00> : vector<8x128xf32>
    %2 = tpu.matmul %0, %1, %cst {dimension_numbers = #tpu.dot_dimension_numbers<[1], [0], [0], [1], [0, 0, 1, 1], [], []>} : vector<8x32xf32>, vector<32x128xf32>, vector<8x128xf32> -> vector<8x128xf32>
    %c0_3 = arith.constant 0 : index
    %c0_4 = arith.constant 0 : index
    %3 = vector.load %arg3[%c0_3, %c0_4] : memref<1x128xf32, #tpu.memory_space<vmem>>, vector<1x128xf32>
    %4 = vector.broadcast %3 : vector<1x128xf32> to vector<8x128xf32>
    %5 = arith.addf %2, %4 : vector<8x128xf32>
    %cst_5 = arith.constant 0.000000e+00 : f32
    %6 = vector.broadcast %cst_5 : f32 to vector<8x128xf32>
    %7 = arith.maximumf %5, %6 : vector<8x128xf32>
    %c0_6 = arith.constant 0 : index
    %c0_7 = arith.constant 0 : index
    %8 = vector.load %arg4[%c0_6, %c0_7] : memref<128x64xf32, #tpu.memory_space<vmem>>, vector<128x64xf32>
    %cst_8 = arith.constant dense<0.000000e+00> : vector<8x64xf32>
    %9 = tpu.matmul %7, %8, %cst_8 {dimension_numbers = #tpu.dot_dimension_numbers<[1], [0], [0], [1], [0, 0, 1, 1], [], []>} : vector<8x128xf32>, vector<128x64xf32>, vector<8x64xf32> -> vector<8x64xf32>
    %c0_9 = arith.constant 0 : index
    %c0_10 = arith.constant 0 : index
    %10 = vector.load %arg5[%c0_9, %c0_10] : memref<1x64xf32, #tpu.memory_space<vmem>>, vector<1x64xf32>
    %11 = vector.broadcast %10 : vector<1x64xf32> to vector<8x64xf32>
    %12 = arith.addf %9, %11 : vector<8x64xf32>
    %cst_11 = arith.constant 0.000000e+00 : f32
    %13 = vector.broadcast %cst_11 : f32 to vector<8x64xf32>
    %14 = arith.maximumf %12, %13 : vector<8x64xf32>
    %c0_12 = arith.constant 0 : index
    %c0_13 = arith.constant 0 : index
    %15 = vector.load %arg6[%c0_12, %c0_13] : memref<64x128xf32, #tpu.memory_space<vmem>>, vector<64x128xf32>
    %cst_14 = arith.constant dense<0.000000e+00> : vector<8x128xf32>
    %16 = tpu.matmul %14, %15, %cst_14 {dimension_numbers = #tpu.dot_dimension_numbers<[1], [0], [0], [1], [0, 0, 1, 1], [], []>} : vector<8x64xf32>, vector<64x128xf32>, vector<8x128xf32> -> vector<8x128xf32>
    %c0_15 = arith.constant 0 : index
    %c0_16 = arith.constant 0 : index
    %17 = vector.load %arg7[%c0_15, %c0_16] : memref<1x128xf32, #tpu.memory_space<vmem>>, vector<1x128xf32>
    %18 = vector.broadcast %17 : vector<1x128xf32> to vector<8x128xf32>
    %19 = arith.addf %16, %18 : vector<8x128xf32>
    %cst_17 = arith.constant 0.000000e+00 : f32
    %20 = vector.broadcast %cst_17 : f32 to vector<8x128xf32>
    %21 = arith.maximumf %19, %20 : vector<8x128xf32>
    %c0_18 = arith.constant 0 : index
    %c0_19 = arith.constant 0 : index
    %22 = vector.load %arg8[%c0_18, %c0_19] : memref<128x64xf32, #tpu.memory_space<vmem>>, vector<128x64xf32>
    %cst_20 = arith.constant dense<0.000000e+00> : vector<8x64xf32>
    %23 = tpu.matmul %21, %22, %cst_20 {dimension_numbers = #tpu.dot_dimension_numbers<[1], [0], [0], [1], [0, 0, 1, 1], [], []>} : vector<8x128xf32>, vector<128x64xf32>, vector<8x64xf32> -> vector<8x64xf32>
    %c0_21 = arith.constant 0 : index
    %c0_22 = arith.constant 0 : index
    %24 = vector.load %arg9[%c0_21, %c0_22] : memref<1x64xf32, #tpu.memory_space<vmem>>, vector<1x64xf32>
    %25 = vector.broadcast %24 : vector<1x64xf32> to vector<8x64xf32>
    %26 = arith.addf %23, %25 : vector<8x64xf32>
    %cst_23 = arith.constant 0.000000e+00 : f32
    %27 = vector.broadcast %cst_23 : f32 to vector<8x64xf32>
    %28 = arith.maximumf %26, %27 : vector<8x64xf32>
    %29 = arith.addf %28, %14 : vector<8x64xf32>
    %c0_24 = arith.constant 0 : index
    %c0_25 = arith.constant 0 : index
    %30 = vector.load %arg10[%c0_24, %c0_25] : memref<8x64xf32, #tpu.memory_space<vmem>>, vector<8x64xf32>
    tpu.vector_store %arg10[%c0_24, %c0_25], %29 {strides = array<i32>} : memref<8x64xf32, #tpu.memory_space<vmem>>, vector<8x64xf32>,
    return
  }
  func.func @transform_0(%arg0: i32) -> (i32, i32) {
    %c0_i32 = arith.constant 0 : i32
    %c0_i32_0 = arith.constant 0 : i32
    return %arg0, %c0_i32 : i32, i32
  }
  func.func @transform_1(%arg0: i32) -> (i32, i32) {
    %c0_i32 = arith.constant 0 : i32
    %c0_i32_0 = arith.constant 0 : i32
    %c0_i32_1 = arith.constant 0 : i32
    return %c0_i32, %c0_i32_0 : i32, i32
  }
  func.func @transform_2(%arg0: i32) -> (i32, i32) {
    %c0_i32 = arith.constant 0 : i32
    %c0_i32_0 = arith.constant 0 : i32
    %c0_i32_1 = arith.constant 0 : i32
    return %c0_i32, %c0_i32_0 : i32, i32
  }
  func.func @transform_3(%arg0: i32) -> (i32, i32) {
    %c0_i32 = arith.constant 0 : i32
    %c0_i32_0 = arith.constant 0 : i32
    %c0_i32_1 = arith.constant 0 : i32
    return %c0_i32, %c0_i32_0 : i32, i32
  }
  func.func @transform_4(%arg0: i32) -> (i32, i32) {
    %c0_i32 = arith.constant 0 : i32
    %c0_i32_0 = arith.constant 0 : i32
    %c0_i32_1 = arith.constant 0 : i32
    return %c0_i32, %c0_i32_0 : i32, i32
  }
  func.func @transform_5(%arg0: i32) -> (i32, i32) {
    %c0_i32 = arith.constant 0 : i32
    %c0_i32_0 = arith.constant 0 : i32
    %c0_i32_1 = arith.constant 0 : i32
    return %c0_i32, %c0_i32_0 : i32, i32
  }
  func.func @transform_6(%arg0: i32) -> (i32, i32) {
    %c0_i32 = arith.constant 0 : i32
    %c0_i32_0 = arith.constant 0 : i32
    %c0_i32_1 = arith.constant 0 : i32
    return %c0_i32, %c0_i32_0 : i32, i32
  }
  func.func @transform_7(%arg0: i32) -> (i32, i32) {
    %c0_i32 = arith.constant 0 : i32
    %c0_i32_0 = arith.constant 0 : i32
    %c0_i32_1 = arith.constant 0 : i32
    return %c0_i32, %c0_i32_0 : i32, i32
  }
  func.func @transform_8(%arg0: i32) -> (i32, i32) {
    %c0_i32 = arith.constant 0 : i32
    %c0_i32_0 = arith.constant 0 : i32
    %c0_i32_1 = arith.constant 0 : i32
    return %c0_i32, %c0_i32_0 : i32, i32
  }
  func.func @transform_9(%arg0: i32) -> (i32, i32) {
    %c0_i32 = arith.constant 0 : i32
    %c0_i32_0 = arith.constant 0 : i32
    return %arg0, %c0_i32 : i32, i32
  }
}

</mosaic_0001>

<llo_original>
// kernel: tpu_custom_call.1
$region0: #{tpu_custom_call.1}
  #allocation0 [shape = 'u32[]', space=smem, size = 0x4, offset = 0x4, fixed_abs, tag = 'smem constant byte address 0x4 - core index']
  #allocation1 [shape = 'u32[72,128]{1,0:T(1,128)}', space=vmem, size = 0x9000, scoped, tag = 'internal scratch']
  %s0 = inlined_call_operand.vmem [shape: f32[8,32], index: 0, kind: input, shape index: {}]
  %s1 = inlined_call_operand.vmem [shape: f32[32,128], index: 1, kind: input, shape index: {}]
  %s2 = inlined_call_operand.vmem [shape: f32[1,128], index: 2, kind: input, shape index: {}]
  %s3 = inlined_call_operand.vmem [shape: f32[128,64], index: 3, kind: input, shape index: {}]
  %s4 = inlined_call_operand.vmem [shape: f32[1,64], index: 4, kind: input, shape index: {}]
  %s5 = inlined_call_operand.vmem [shape: f32[64,128], index: 5, kind: input, shape index: {}]
  %s6 = inlined_call_operand.vmem [shape: f32[1,128], index: 6, kind: input, shape index: {}]
  %s7 = inlined_call_operand.vmem [shape: f32[128,64], index: 7, kind: input, shape index: {}]
  %s8 = inlined_call_operand.vmem [shape: f32[1,64], index: 8, kind: input, shape index: {}]
  %s9 = inlined_call_operand.hbm [shape: f32[8,64], index: 9, kind: output, shape index: {}]
  %s10 = sld [smem:[#allocation0]]
  $region46: #{tpu_custom_call.1} parent=0
    _
  %s12 = ssub.s32 1, %s10
  %s13 = scalar_select 0, %s12, %s10
  $region1: #{tpu_custom_call.1} parent=0
    #allocation2 [shape = 'u8[4096]{0}', space=vmem, size = 0x1000, scoped, tag = 'output window, operand 0, single buffered']
    #allocation3 [shape = 's32[1]{0}', space=sflag, size = 0x4, scoped, tag = 'scoped memory for tpu_custom_call.1']
    %14 = vsyncpa [#allocation3], 0
    // Predicated region
    $region2: #{tpu_custom_call.1} parent=1 // pred_check
      _
    $region3: #{tpu_custom_call.1} parent=1 // pred_check_branch
      %16 = sbr.rel (0) target = $region5
    $region4: #{tpu_custom_call.1} parent=1 // pred_region
      _
    $region5: #{tpu_custom_call.1} parent=1 // pred_fallthru
      _
    // Predicated region
    $region6: #{tpu_custom_call.1} parent=1 // pred_check
      _
    $region7: #{tpu_custom_call.1} parent=1 // pred_check_branch
      %18 = sbr.rel (0) target = $region9
    $region8: #{tpu_custom_call.1} parent=1 // pred_region
      _
    $region9: #{tpu_custom_call.1} parent=1 // pred_fallthru
      _
    // Predicated region
    $region10: #{tpu_custom_call.1} parent=1 // pred_check
      _
    $region11: #{tpu_custom_call.1} parent=1 // pred_check_branch
      %20 = sbr.rel (0) target = $region13
    $region12: #{tpu_custom_call.1} parent=1 // pred_region
      _
    $region13: #{tpu_custom_call.1} parent=1 // pred_fallthru
      _
    // Predicated region
    $region14: #{tpu_custom_call.1} parent=1 // pred_check
      _
    $region15: #{tpu_custom_call.1} parent=1 // pred_check_branch
      %22 = sbr.rel (0) target = $region17
    $region16: #{tpu_custom_call.1} parent=1 // pred_region
      _
    $region17: #{tpu_custom_call.1} parent=1 // pred_fallthru
      _
    // Predicated region
    $region18: #{tpu_custom_call.1} parent=1 // pred_check
      _
    $region19: #{tpu_custom_call.1} parent=1 // pred_check_branch
      %24 = sbr.rel (0) target = $region21
    $region20: #{tpu_custom_call.1} parent=1 // pred_region
      _
    $region21: #{tpu_custom_call.1} parent=1 // pred_fallthru
      _
    // Predicated region
    $region22: #{tpu_custom_call.1} parent=1 // pred_check
      _
    $region23: #{tpu_custom_call.1} parent=1 // pred_check_branch
      %26 = sbr.rel (0) target = $region25
    $region24: #{tpu_custom_call.1} parent=1 // pred_region
      _
    $region25: #{tpu_custom_call.1} parent=1 // pred_fallthru
      _
    // Predicated region
    $region26: #{tpu_custom_call.1} parent=1 // pred_check
      _
    $region27: #{tpu_custom_call.1} parent=1 // pred_check_branch
      %28 = sbr.rel (0) target = $region29
    $region28: #{tpu_custom_call.1} parent=1 // pred_region
      _
    $region29: #{tpu_custom_call.1} parent=1 // pred_fallthru
      _
    // Predicated region
    $region30: #{tpu_custom_call.1} parent=1 // pred_check
      _
    $region31: #{tpu_custom_call.1} parent=1 // pred_check_branch
      %30 = sbr.rel (0) target = $region33
    $region32: #{tpu_custom_call.1} parent=1 // pred_region
      _
    $region33: #{tpu_custom_call.1} parent=1 // pred_fallthru
      _
    // Predicated region
    $region34: #{tpu_custom_call.1} parent=1 // pred_check
      _
    $region35: #{tpu_custom_call.1} parent=1 // pred_check_branch
      %32 = sbr.rel (0) target = $region37
    $region36: #{tpu_custom_call.1} parent=1 // pred_region
      _
    $region37: #{tpu_custom_call.1} parent=1 // pred_fallthru
      _
    %v33 = vld [vmem:[%s0] sm:$0xff]
    %v34 = vld [vmem:[%s1] sm:$0xff]
    %v35 = vld [vmem:[%s1 + $0x8] sm:$0xff]
    %v36 = vld [vmem:[%s1 + $0x10] sm:$0xff]
    %v37 = vld [vmem:[%s1 + $0x18] sm:$0xff]
    %v38 = vld [vmem:[%s2] sm:$0x1]
    %v40 = vperm.slane %v38, 0
    %vm42 = vcmask 261120
    %v44 = vsel %vm42, %v33, 0
    %46 = vmatpush.msra.mxu0 0.0
    %47 = vmatpush.msra.mxu0 0.0
    %48 = vmatpush.msra.mxu0 0.0
    %49 = vmatpush.msra.mxu0 0.0
    %50 = vmatpush.msra.mxu0 0.0
    %51 = vmatpush.msra.mxu0 0.0
    %52 = vmatpush.msra.mxu0 0.0
    %53 = vmatpush.msra.mxu0 0.0
    %54 = vmatpush.msra.mxu0 0.0
    %55 = vmatpush.msra.mxu0 0.0
    %56 = vmatpush.msra.mxu0 0.0
    %57 = vmatpush.msra.mxu0 0.0
    %58 = vmatpush.msra.mxu0 %v37
    %59 = vmatpush.msra.mxu0 %v36
    %60 = vmatpush.msra.mxu0 %v35
    %61 = vmatpush.msra.mxu0 %v34
    %62 = vmatmul.f32.gmra.mxu0 %v44
    %v63 = vpop.f32.mrf.mxu0
    %v64 = vadd.f32 %v40, %v63
    %65 = vdwg.mxu0
    %v66 = vmax.f32 %v64, 0.0
    %v67 = vld [vmem:[%s3] sm:$0xff]
    %v68 = vld [vmem:[%s3 + $0x8] sm:$0xff]
    %v69 = vld [vmem:[%s3 + $0x10] sm:$0xff]
    %v70 = vld [vmem:[%s3 + $0x18] sm:$0xff]
    %v71 = vld [vmem:[%s3 + $0x20] sm:$0xff]
    %v72 = vld [vmem:[%s3 + $0x28] sm:$0xff]
    %v73 = vld [vmem:[%s3 + $0x30] sm:$0xff]
    %v74 = vld [vmem:[%s3 + $0x38] sm:$0xff]
    %v75 = vld [vmem:[%s3 + $0x40] sm:$0xff]
    %v76 = vld [vmem:[%s3 + $0x48] sm:$0xff]
    %v77 = vld [vmem:[%s3 + $0x50] sm:$0xff]
    %v78 = vld [vmem:[%s3 + $0x58] sm:$0xff]
    %v79 = vld [vmem:[%s3 + $0x60] sm:$0xff]
    %v80 = vld [vmem:[%s3 + $0x68] sm:$0xff]
    %v81 = vld [vmem:[%s3 + $0x70] sm:$0xff]
    %v82 = vld [vmem:[%s3 + $0x78] sm:$0xff]
    %v83 = vld [vmem:[%s4] sm:$0x1]
    %v85 = vperm.slane %v83, 0
    %87 = vmatpush.msra.mxu0 %v82
    %88 = vmatpush.msra.mxu0 %v81
    %89 = vmatpush.msra.mxu0 %v80
    %90 = vmatpush.msra.mxu0 %v79
    %91 = vmatpush.msra.mxu0 %v78
    %92 = vmatpush.msra.mxu0 %v77
    %93 = vmatpush.msra.mxu0 %v76
    %94 = vmatpush.msra.mxu0 %v75
    %95 = vmatpush.msra.mxu0 %v74
    %96 = vmatpush.msra.mxu0 %v73
    %97 = vmatpush.msra.mxu0 %v72
    %98 = vmatpush.msra.mxu0 %v71
    %99 = vmatpush.msra.mxu0 %v70
    %100 = vmatpush.msra.mxu0 %v69
    %101 = vmatpush.msra.mxu0 %v68
    %102 = vmatpush.msra.mxu0 %v67
    %103 = vmatmul.f32.gmra.mxu0 %v66
    %v104 = vpop.f32.mrf.mxu0
    %v105 = vadd.f32 %v85, %v104
    %106 = vdwg.mxu0
    %v107 = vmax.f32 %v105, 0.0
    %v108 = vld [vmem:[%s5] sm:$0xff]
    %v109 = vld [vmem:[%s5 + $0x8] sm:$0xff]
    %v110 = vld [vmem:[%s5 + $0x10] sm:$0xff]
    %v111 = vld [vmem:[%s5 + $0x18] sm:$0xff]
    %v112 = vld [vmem:[%s5 + $0x20] sm:$0xff]
    %v113 = vld [vmem:[%s5 + $0x28] sm:$0xff]
    %v114 = vld [vmem:[%s5 + $0x30] sm:$0xff]
    %v115 = vld [vmem:[%s5 + $0x38] sm:$0xff]
    %v116 = vld [vmem:[%s6] sm:$0x1]
    %v118 = vperm.slane %v116, 0
    %vm120 = vcmask 523264
    %v122 = vsel %vm120, %v107, 0
    %124 = vmatpush.msra.mxu0 0.0
    %125 = vmatpush.msra.mxu0 0.0
    %126 = vmatpush.msra.mxu0 0.0
    %127 = vmatpush.msra.mxu0 0.0
    %128 = vmatpush.msra.mxu0 0.0
    %129 = vmatpush.msra.mxu0 0.0
    %130 = vmatpush.msra.mxu0 0.0
    %131 = vmatpush.msra.mxu0 0.0
    %132 = vmatpush.msra.mxu0 %v115
    %133 = vmatpush.msra.mxu0 %v114
    %134 = vmatpush.msra.mxu0 %v113
    %135 = vmatpush.msra.mxu0 %v112
    %136 = vmatpush.msra.mxu0 %v111
    %137 = vmatpush.msra.mxu0 %v110
    %138 = vmatpush.msra.mxu0 %v109
    %139 = vmatpush.msra.mxu0 %v108
    %140 = vmatmul.f32.gmra.mxu0 %v122
    %v141 = vpop.f32.mrf.mxu0
    %v142 = vadd.f32 %v118, %v141
    %143 = vdwg.mxu0
    %v144 = vmax.f32 %v142, 0.0
    %v145 = vld [vmem:[%s7] sm:$0xff]
    %v146 = vld [vmem:[%s7 + $0x8] sm:$0xff]
    %v147 = vld [vmem:[%s7 + $0x10] sm:$0xff]
    %v148 = vld [vmem:[%s7 + $0x18] sm:$0xff]
    %v149 = vld [vmem:[%s7 + $0x20] sm:$0xff]
    %v150 = vld [vmem:[%s7 + $0x28] sm:$0xff]
    %v151 = vld [vmem:[%s7 + $0x30] sm:$0xff]
    %v152 = vld [vmem:[%s7 + $0x38] sm:$0xff]
    %v153 = vld [vmem:[%s7 + $0x40] sm:$0xff]
    %v154 = vld [vmem:[%s7 + $0x48] sm:$0xff]
    %v155 = vld [vmem:[%s7 + $0x50] sm:$0xff]
    %v156 = vld [vmem:[%s7 + $0x58] sm:$0xff]
    %v157 = vld [vmem:[%s7 + $0x60] sm:$0xff]
    %v158 = vld [vmem:[%s7 + $0x68] sm:$0xff]
    %v159 = vld [vmem:[%s7 + $0x70] sm:$0xff]
    %v160 = vld [vmem:[%s7 + $0x78] sm:$0xff]
    %v161 = vld [vmem:[%s8] sm:$0x1]
    %v163 = vperm.slane %v161, 0
    %165 = vmatpush.msra.mxu0 %v160
    %166 = vmatpush.msra.mxu0 %v159
    %167 = vmatpush.msra.mxu0 %v158
    %168 = vmatpush.msra.mxu0 %v157
    %169 = vmatpush.msra.mxu0 %v156
    %170 = vmatpush.msra.mxu0 %v155
    %171 = vmatpush.msra.mxu0 %v154
    %172 = vmatpush.msra.mxu0 %v153
    %173 = vmatpush.msra.mxu0 %v152
    %174 = vmatpush.msra.mxu0 %v151
    %175 = vmatpush.msra.mxu0 %v150
    %176 = vmatpush.msra.mxu0 %v149
    %177 = vmatpush.msra.mxu0 %v148
    %178 = vmatpush.msra.mxu0 %v147
    %179 = vmatpush.msra.mxu0 %v146
    %180 = vmatpush.msra.mxu0 %v145
    %181 = vmatmul.f32.gmra.mxu0 %v144
    %v182 = vpop.f32.mrf.mxu0
    %v183 = vadd.f32 %v163, %v182
    %184 = vdwg.mxu0
    %v185 = vmax.f32 %v183, 0.0
    %v186 = vadd.f32 %v185, %v107
    %187 = vst.msk [vmem:[#allocation2] sm:$0xff] %vm120, %v186
    // Predicated region
    $region38: #{tpu_custom_call.1} parent=1 // pred_check
      _
    $region39: #{tpu_custom_call.1} parent=1 // pred_check_branch
      %189 = sbr.rel (0) target = $region41
    $region40: #{tpu_custom_call.1} parent=1 // pred_region
      %191 = vsyncadd [#allocation3], 0
      %s193 = sshll.u32 [#allocation2], 4
      %s194 = int_to_ptr.vmem [resolvable:$true] %s193
      %s195 = sshll.u32 %s9, 4
      %s196 = int_to_ptr.hbm [resolvable:$true] %s195
      %198 = dma.vmem_to_hbm [thread:$0]  %s194, 128, %s196, [#allocation3]
    $region41: #{tpu_custom_call.1} parent=1 // pred_fallthru
      _
    // Predicated region
    $region42: #{tpu_custom_call.1} parent=1 // pred_check
      _
    $region43: #{tpu_custom_call.1} parent=1 // pred_check_branch
      %200 = sbr.rel (0) target = $region45
    $region44: #{tpu_custom_call.1} parent=1 // pred_region
      %202 = dma.done [#allocation3], 128
    $region45: #{tpu_custom_call.1} parent=1 // pred_fallthru
      _
    %203 = vsyncpa [#allocation3], 1

</llo_original>
